<compile_context>
chip_gen: v6e
topology: v6e:2x2x1
jax: 0.10.0
libtpu: 0.0.40
codegen_flags: <defaults>
</compile_context>

<pallas_src>
import numpy as np
import jax
import jax.numpy as jnp
from jax.experimental import pallas as pl
from jax.experimental.pallas import tpu as pltpu


def _round_up(v: int, m: int) -> int:
    return ((v + m - 1) // m) * m


def _dft_fused_kernel(x_ref, w_ref, out_ref):
    # One MXU matmul against the fused (real|imag) DFT basis.
    out_ref[...] = jnp.dot(
        x_ref[...], w_ref[...], preferred_element_type=jnp.float32
    ).astype(out_ref.dtype)


def make_dft_params(input_size: int, dtype=jnp.float32):
    """Deterministic parameter init, identical to the PyTorch __init__."""
    n = np.arange(input_size, dtype=np.float32)            # (N,)
    f = n.reshape(-1, 1)                                    # (N, 1)
    ang = 2.0 * np.pi * f * n / float(input_size)           # (N, N)
    w_real = jnp.asarray(np.cos(ang), dtype=dtype)
    w_imag = jnp.asarray(np.sin(ang), dtype=dtype)
    return w_real, w_imag


def dft_layer(
    x,
    w_real,
    w_imag,
    *,
    block_m: int = 512,
    compute_dtype=None,
    vmem_budget_bytes: int = 40 * 1024 * 1024,   # v7x-safe (64 MiB physical)
    min_pallas_rows: int = 64,
):
    """Pallas implementation of DFTLayer.forward.

    x: (..., N).  Returns (real, imag), each (..., N), float32.
    """
    orig_shape = x.shape
    n = orig_shape[-1]
    x2d = x.reshape(-1, n)                                  # (M, N)
    m = x2d.shape[0]

    # ---- Tiny-problem dispatch: Pallas launch/grid overhead would dominate.
    if m < min_pallas_rows or n < 8:
        real = jnp.matmul(x2d, w_real).astype(jnp.float32)
        imag = jnp.matmul(x2d, w_imag).astype(jnp.float32)
        return real.reshape(orig_shape), imag.reshape(orig_shape)

    # ---- Fused RHS, lane-padded to a multiple of 128 output columns.
    w_fused = jnp.concatenate([w_real, w_imag], axis=1)     # (N, 2N)
    n2 = 2 * n
    n2_pad = max(_round_up(n2, 128), 128)
    if n2_pad != n2:
        w_fused = jnp.pad(w_fused, ((0, 0), (0, n2_pad - n2)))

    if compute_dtype is not None:
        x2d = x2d.astype(compute_dtype)
        w_fused = w_fused.astype(compute_dtype)

    itemsize = jnp.dtype(x2d.dtype).itemsize

    # ---- Pick the M tile: as large as possible under the VMEM budget.
    def footprint(bm_: int) -> int:
        w_bytes = n * n2_pad * itemsize                     # resident weights
        x_bytes = 2 * bm_ * n * itemsize                    # double-buffered in
        o_bytes = 2 * bm_ * n2_pad * 4                      # double-buffered out
        return w_bytes + x_bytes + o_bytes

    bm = min(block_m, _round_up(m, 8))
    bm = _round_up(bm, 8)
    while footprint(bm) > vmem_budget_bytes and bm > 8:
        bm = max(8, _round_up(bm // 2, 8))
    # TODO(synk): if the (N, 2N_pad) weights alone exceed the VMEM budget
    # (very large DFT lengths), tile the contraction / output-column axes with
    # a scratch accumulator (reduction axis last, "arbitrary").

    m_pad = _round_up(m, bm)
    if m_pad != m:
        x2d = jnp.pad(x2d, ((0, m_pad - m), (0, 0)))

    vmem_limit = int(min(max(footprint(bm) + (8 << 20), 32 << 20), 60 << 20))

    out = pl.pallas_call(
        _dft_fused_kernel,
        out_shape=jax.ShapeDtypeStruct((m_pad, n2_pad), jnp.float32),
        grid_spec=pltpu.PrefetchScalarGridSpec(
            num_scalar_prefetch=0,
            grid=(m_pad // bm,),
            in_specs=[
                pl.BlockSpec((bm, n), lambda i: (i, 0)),        # x row tile
                pl.BlockSpec((n, n2_pad), lambda i: (0, 0)),    # weights resident
            ],
            out_specs=pl.BlockSpec((bm, n2_pad), lambda i: (i, 0)),
        ),
        compiler_params=pltpu.CompilerParams(
            dimension_semantics=("parallel",),
            vmem_limit_bytes=vmem_limit,
        ),
    )(x2d, w_fused)

    real = out[:m, :n].reshape(orig_shape)
    imag = out[:m, n:n2].reshape(orig_shape)
    return real, imag


if __name__ == "__main__":
    # Shapes sized so the Pallas path is actually exercised (M = 1024 rows,
    # N = 128 lanes -> fused, padded output width 256; 2 grid steps at bm=512).
    input_size = 128
    batch, seq = 4, 256

    key = jax.random.PRNGKey(0)
    x = jax.random.normal(key, (batch, seq, input_size), dtype=jnp.float32)

    w_real, w_imag = make_dft_params(input_size)

    real, imag = dft_layer(x, w_real, w_imag)
    jax.block_until_ready((real, imag))

    # Reference check against plain JAX matmuls (same math as torch.matmul).
    ref_real = jnp.matmul(x, w_real)
    ref_imag = jnp.matmul(x, w_imag)
    assert real.shape == ref_real.shape and imag.shape == ref_imag.shape
    assert jnp.allclose(real, ref_real, atol=1e-3, rtol=1e-3)
    assert jnp.allclose(imag, ref_imag, atol=1e-3, rtol=1e-3)

    # Toy size from the original module config: exercises the jnp.matmul
    # fallback (Pallas cannot win at 16x32).
    x_tiny = jax.random.normal(key, (2, 8, 32), dtype=jnp.float32)
    wr_t, wi_t = make_dft_params(32)
    r_t, i_t = dft_layer(x_tiny, wr_t, wi_t)
    jax.block_until_ready((r_t, i_t))
    assert jnp.allclose(r_t, jnp.matmul(x_tiny, wr_t), atol=1e-4, rtol=1e-4)
    assert jnp.allclose(i_t, jnp.matmul(x_tiny, wi_t), atol=1e-4, rtol=1e-4)

    print("KERNEL_OK")
</pallas_src>

<mosaic_0001>
module attributes {stable_mosaic.version = 11 : i64} {
  func.func @_dft_fused_kernel(%arg0: i32, %arg1: memref<512x128xf32, #tpu.memory_space<vmem>>, %arg2: memref<128x256xf32, #tpu.memory_space<vmem>>, %arg3: memref<512x256xf32, #tpu.memory_space<vmem>>) attributes {dimension_semantics = [#tpu.dimension_semantics<parallel>], iteration_bounds = array<i64: 2>, scalar_prefetch = 0 : i64, scratch_operands = 0 : i64, tpu.core_type = #tpu.core_type<tc>, window_params = [{transform_indices = @transform_0, window_bounds = array<i64: 512, 128>}, {pipeline_mode = #tpu.pipeline_mode<synchronous>, transform_indices = @transform_1, window_bounds = array<i64: 128, 256>}, {transform_indices = @transform_2, window_bounds = array<i64: 512, 256>}]} {
    %c0 = arith.constant 0 : index
    %c0_0 = arith.constant 0 : index
    %0 = vector.load %arg1[%c0, %c0_0] : memref<512x128xf32, #tpu.memory_space<vmem>>, vector<512x128xf32>
    %c0_1 = arith.constant 0 : index
    %c0_2 = arith.constant 0 : index
    %1 = vector.load %arg2[%c0_1, %c0_2] : memref<128x256xf32, #tpu.memory_space<vmem>>, vector<128x256xf32>
    %cst = arith.constant dense<0.000000e+00> : vector<512x256xf32>
    %2 = tpu.matmul %0, %1, %cst {dimension_numbers = #tpu.dot_dimension_numbers<[1], [0], [0], [1], [0, 0, 1, 1], [], []>} : vector<512x128xf32>, vector<128x256xf32>, vector<512x256xf32> -> vector<512x256xf32>
    %c0_3 = arith.constant 0 : index
    %c0_4 = arith.constant 0 : index
    %3 = vector.load %arg3[%c0_3, %c0_4] : memref<512x256xf32, #tpu.memory_space<vmem>>, vector<512x256xf32>
    tpu.vector_store %arg3[%c0_3, %c0_4], %2 {strides = array<i32>} : memref<512x256xf32, #tpu.memory_space<vmem>>, vector<512x256xf32>,
    return
  }
  func.func @transform_0(%arg0: i32) -> (i32, i32) {
    %c0_i32 = arith.constant 0 : i32
    %c0_i32_0 = arith.constant 0 : i32
    return %arg0, %c0_i32 : i32, i32
  }
  func.func @transform_1(%arg0: i32) -> (i32, i32) {
    %c0_i32 = arith.constant 0 : i32
    %c0_i32_0 = arith.constant 0 : i32
    %c0_i32_1 = arith.constant 0 : i32
    return %c0_i32, %c0_i32_0 : i32, i32
  }
  func.func @transform_2(%arg0: i32) -> (i32, i32) {
    %c0_i32 = arith.constant 0 : i32
    %c0_i32_0 = arith.constant 0 : i32
    return %arg0, %c0_i32 : i32, i32
  }
}

</mosaic_0001>

<llo_original>
// kernel: tpu_custom_call.1
$region0: #{tpu_custom_call.1}
  #allocation0 [shape = 'u32[]', space=smem, size = 0x4, offset = 0x4, fixed_abs, tag = 'smem constant byte address 0x4 - core index']
  #allocation1 [shape = 'u32[144,128]{1,0:T(1,128)}', space=vmem, size = 0x12000, scoped, tag = 'internal scratch']
  %s0 = inlined_call_operand.hbm [shape: f32[1024,128], index: 0, kind: input, shape index: {}]
  %s1 = inlined_call_operand.hbm [shape: f32[128,256], index: 1, kind: input, shape index: {}]
  %s2 = inlined_call_operand.hbm [shape: f32[1024,256], index: 2, kind: output, shape index: {}]
  %s3 = sld [smem:[#allocation0]]
  $region49: #{tpu_custom_call.1} parent=0
    _
  %s5 = ssub.s32 1, %s3
  %s6 = scalar_select 0, %s5, %s3
  $region1: #{tpu_custom_call.1} parent=0
    #allocation2 [shape = 'u8[524288]{0}', space=vmem, size = 0x80000, scoped, tag = 'input window, operand 0']
    #allocation3 [shape = 's32[2]{0}', space=sflag, size = 0x8, scoped, tag = 'scoped memory for tpu_custom_call.1']
    #allocation4 [shape = 's32[2]{0}', space=sflag, size = 0x8, scoped, tag = 'scoped memory for tpu_custom_call.1']
    #allocation5 [shape = 'u8[131072]{0}', space=vmem, size = 0x20000, scoped, tag = 'input window, operand 1, single buffered']
    #allocation6 [shape = 's32[1]{0}', space=sflag, size = 0x4, scoped, tag = 'scoped memory for tpu_custom_call.1']
    #allocation7 [shape = 'u8[1048576]{0}', space=vmem, size = 0x100000, scoped, tag = 'output window, operand 0']
    %7 = vsyncpa [#allocation3], 0
    %s8 = scalar_lea.sflag [#allocation3], 1
    %9 = vsyncpa %s8, 0
    %10 = vsyncpa [#allocation6], 0
    %11 = vsyncpa [#allocation4], 0
    %s12 = scalar_lea.sflag [#allocation4], 1
    %13 = vsyncpa %s12, 0
    loop: start=0, step=1, limit=4
    $region2: #{tpu_custom_call.1} parent=1 // loop_pre_header
      _
    $region3: #{tpu_custom_call.1} parent=1 // loop_header
      %s15 = sphi 0, %s19
      %p16 = scmp.ge.s32.totalorder %s15, 4
      %s25 = sphi 0, %s27
      %s28 = sphi 0, %s25
      %s29 = sphi 0, %s28
      %s45 = sphi 0, %s29
      %s49 = sphi 0, %s49
      %s51 = sphi 0, %s49
      %s52 = sphi 0, %s51
      %s66 = sphi 0, %s52
      %s72 = sphi 0, %s74
      %s75 = sphi 0, %s72
      %s76 = sphi 0, %s75
      %s92 = sphi 0, %s76
    $region4: #{tpu_custom_call.1} parent=1 // loop_header_branch
      %18 = sbr.rel (%p16) target = $region8
    $region5: #{tpu_custom_call.1} parent=1 // loop_body
      %s20 = ssub.s32 %s15, 1
      %s21 = ssub.s32 %s15, 2
      %s22 = sadd.s32 %s15, 1
      %s23 = ssub.s32 %s15, %s22
      %p24 = scmp.eq.s32.totalorder %s23, 0
      %s26 = sadd.s32 %s25, 1
      %s27 = scalar_select %p24, %s25, %s26
      %p30 = pneg %p24
      %p31 = scmp.eq.s32.totalorder %s15, 1
      %p32 = por %p30, %p31
      %p33 = scmp.ne.s32.totalorder %s25, %s28
      %p34 = scmp.eq.s32.totalorder %s15, 0
      %p35 = por %p33, %p34
      %p36 = scmp.ne.s32.totalorder %s25, %s28
      %p37 = scmp.eq.s32.totalorder %s20, 1
      %p38 = por %p36, %p37
      %p39 = scmp.ne.s32.totalorder %s28, %s29
      %p40 = scmp.eq.s32.totalorder %s20, 0
      %p41 = por %p39, %p40
      %p42 = scmp.ne.s32.totalorder %s28, %s29
      %p43 = scmp.eq.s32.totalorder %s21, 1
      %p44 = por %p42, %p43
      %p46 = scmp.ne.s32.totalorder %s29, %s45
      %p47 = scmp.eq.s32.totalorder %s21, 0
      %p48 = por %p46, %p47
      %s50 = sadd.s32 %s49, 1
      %p53 = scmp.eq.s32.totalorder %s15, 1
      %p54 = scmp.ne.s32.totalorder %s49, %s51
      %p55 = scmp.eq.s32.totalorder %s15, 0
      %p56 = por %p54, %p55
      %p57 = scmp.ne.s32.totalorder %s49, %s51
      %p58 = scmp.eq.s32.totalorder %s20, 1
      %p59 = por %p57, %p58
      %p60 = scmp.ne.s32.totalorder %s51, %s52
      %p61 = scmp.eq.s32.totalorder %s20, 0
      %p62 = por %p60, %p61
      %p63 = scmp.ne.s32.totalorder %s51, %s52
      %p64 = scmp.eq.s32.totalorder %s21, 1
      %p65 = por %p63, %p64
      %p67 = scmp.ne.s32.totalorder %s52, %s66
      %p68 = scmp.eq.s32.totalorder %s21, 0
      %p69 = por %p67, %p68
      %s70 = ssub.s32 %s15, %s22
      %p71 = scmp.eq.s32.totalorder %s70, 0
      %s73 = sadd.s32 %s72, 1
      %s74 = scalar_select %p71, %s72, %s73
      %p77 = pneg %p71
      %p78 = scmp.eq.s32.totalorder %s15, 1
      %p79 = por %p77, %p78
      %p80 = scmp.ne.s32.totalorder %s72, %s75
      %p81 = scmp.eq.s32.totalorder %s15, 0
      %p82 = por %p80, %p81
      %p83 = scmp.ne.s32.totalorder %s72, %s75
      %p84 = scmp.eq.s32.totalorder %s20, 1
      %p85 = por %p83, %p84
      %p86 = scmp.ne.s32.totalorder %s75, %s76
      %p87 = scmp.eq.s32.totalorder %s20, 0
      %p88 = por %p86, %p87
      %p89 = scmp.ne.s32.totalorder %s75, %s76
      %p90 = scmp.eq.s32.totalorder %s21, 1
      %p91 = por %p89, %p90
      %p93 = scmp.ne.s32.totalorder %s76, %s92
      %p94 = scmp.eq.s32.totalorder %s21, 0
      %p95 = por %p93, %p94
      %p96 = scmp.le.s32.totalorder 1, %s15
      %p97 = scmp.lt.s32.totalorder %s15, 3
      %p98 = pnand %p96, %p97
      %p99 = pneg %p98
      // Predicated region
      $region9: #{tpu_custom_call.1} parent=5 // pred_check
        _
      $region10: #{tpu_custom_call.1} parent=5 // pred_check_branch
        %101 = sbr.rel (%p98) target = $region12
      $region11: #{tpu_custom_call.1} parent=5 // pred_region
        %s102 = ssub.s32 %s15, 1
        // Predicated region
        $region13: #{tpu_custom_call.1} parent=11 // pred_check
          %p103 = pneg %p62
        $region14: #{tpu_custom_call.1} parent=11 // pred_check_branch
          %105 = sbr.rel (%p103) target = $region16
        $region15: #{tpu_custom_call.1} parent=11 // pred_region
          %s107 = ssub.s32 4096, 4096
          %108 = vsyncadd [#allocation6], %s107
          %s109 = sshll.u32 [#allocation5], 4
          %s110 = int_to_ptr.vmem [resolvable:$true] %s109
          %115 = dma.hbm_to_vmem [thread:$0]  %s1, 4096, %s110, [#allocation6], 256, 256, 16
        $region16: #{tpu_custom_call.1} parent=11 // pred_fallthru
          _
      $region12: #{tpu_custom_call.1} parent=5 // pred_fallthru
        _
      %p116 = scmp.lt.s32.totalorder %s15, 2
      // Predicated region
      $region17: #{tpu_custom_call.1} parent=5 // pred_check
        %p117 = pneg %p116
      $region18: #{tpu_custom_call.1} parent=5 // pred_check_branch
        %119 = sbr.rel (%p117) target = $region20
      $region19: #{tpu_custom_call.1} parent=5 // pred_region
        // Predicated region
        $region21: #{tpu_custom_call.1} parent=19 // pred_check
          %p120 = pneg %p35
        $region22: #{tpu_custom_call.1} parent=19 // pred_check_branch
          %122 = sbr.rel (%p120) target = $region24
        $region23: #{tpu_custom_call.1} parent=19 // pred_region
          %s123 = sand.u32 %s25, 1
          %s124 = scalar_lea.sflag [#allocation3], %s123
          %s125 = sand.u32 %s25, 1
          %s126 = smul.addr %s125, 512
          %s127 = scalar_lea.vmem [#allocation2], %s126
          %s128 = smul.u32 64, %s15
          %s130 = ssub.s32 8192, 8192
          %131 = vsyncadd %s124, %s130
          %s132 = smul.addr %s128, 128
          %s133 = scalar_lea.hbm %s0, %s132
          %s134 = sshll.u32 %s127, 4
          %s135 = int_to_ptr.vmem [resolvable:$true] %s134
          %140 = dma.hbm_to_vmem [thread:$0]  %s133, 8192, %s135, %s124, 128, 128, 8
        $region24: #{tpu_custom_call.1} parent=19 // pred_fallthru
          _
      $region20: #{tpu_custom_call.1} parent=5 // pred_fallthru
        _
      %p141 = scmp.le.s32.totalorder 1, %s15
      %p142 = scmp.lt.s32.totalorder %s15, 3
      %p143 = pnand %p141, %p142
      %p144 = pneg %p143
      // Predicated region
      $region25: #{tpu_custom_call.1} parent=5 // pred_check
        _
      $region26: #{tpu_custom_call.1} parent=5 // pred_check_branch
        %146 = sbr.rel (%p143) target = $region28
      $region27: #{tpu_custom_call.1} parent=5 // pred_region
        %s147 = ssub.s32 %s15, 1
        %s148 = sand.u32 %s28, 1
        %s149 = scalar_lea.sflag [#allocation3], %s148
        %s150 = sand.u32 %s28, 1
        %s151 = smul.addr %s150, 512
        %s152 = scalar_lea.vmem [#allocation2], %s151
        // Predicated region
        $region29: #{tpu_custom_call.1} parent=27 // pred_check
          %p153 = pneg %p41
        $region30: #{tpu_custom_call.1} parent=27 // pred_check_branch
          %155 = sbr.rel (%p153) target = $region32
        $region31: #{tpu_custom_call.1} parent=27 // pred_region
          %156 = dma.done %s149, 8192
        $region32: #{tpu_custom_call.1} parent=27 // pred_fallthru
          _
        // Predicated region
        $region33: #{tpu_custom_call.1} parent=27 // pred_check
          %p157 = pneg %p62
        $region34: #{tpu_custom_call.1} parent=27 // pred_check_branch
          %159 = sbr.rel (%p157) target = $region36
        $region35: #{tpu_custom_call.1} parent=27 // pred_region
          %160 = dma.done [#allocation6], 4096
        $region36: #{tpu_custom_call.1} parent=27 // pred_fallthru
          _
        %s161 = sand.u32 %s28, 1
        %s162 = scalar_lea.sflag [#allocation3], %s161
        %s163 = sand.u32 %s28, 1
        %s164 = smul.addr %s163, 512
        %s165 = scalar_lea.vmem [#allocation2], %s164
        %p166 = pneg %p41
        %p167 = pneg %p38
        %p168 = pneg %p62
        %p169 = pneg %p59
        %p170 = pneg %p88
        %p171 = pneg %p85
        %s172 = sand.u32 %s75, 1
        %s173 = scalar_lea.sflag [#allocation4], %s172
        %s174 = sand.u32 %s75, 1
        %s175 = smul.addr %s174, 1024
        %s176 = scalar_lea.vmem [#allocation7], %s175
        %s177 = smul.u32 64, %s20
        %s178 = smul.u32 64, %s20
        %v179 = vld [vmem:[%s152] sm:$0xff]
        %v180 = vld [vmem:[%s152 + $0x8] sm:$0xff]
        %v181 = vld [vmem:[%s152 + $0x10] sm:$0xff]
        %v182 = vld [vmem:[%s152 + $0x18] sm:$0xff]
        %v183 = vld [vmem:[%s152 + $0x20] sm:$0xff]
        %v184 = vld [vmem:[%s152 + $0x28] sm:$0xff]
        %v185 = vld [vmem:[%s152 + $0x30] sm:$0xff]
        %v186 = vld [vmem:[%s152 + $0x38] sm:$0xff]
        %v187 = vld [vmem:[%s152 + $0x40] sm:$0xff]
        %v188 = vld [vmem:[%s152 + $0x48] sm:$0xff]
        %v189 = vld [vmem:[%s152 + $0x50] sm:$0xff]
        %v190 = vld [vmem:[%s152 + $0x58] sm:$0xff]
        %v191 = vld [vmem:[%s152 + $0x60] sm:$0xff]
        %v192 = vld [vmem:[%s152 + $0x68] sm:$0xff]
        %v193 = vld [vmem:[%s152 + $0x70] sm:$0xff]
        %v194 = vld [vmem:[%s152 + $0x78] sm:$0xff]
        %v195 = vld [vmem:[%s152 + $0x80] sm:$0xff]
        %v196 = vld [vmem:[%s152 + $0x88] sm:$0xff]
        %v197 = vld [vmem:[%s152 + $0x90] sm:$0xff]
        %v198 = vld [vmem:[%s152 + $0x98] sm:$0xff]
        %v199 = vld [vmem:[%s152 + $0xa0] sm:$0xff]
        %v200 = vld [vmem:[%s152 + $0xa8] sm:$0xff]
        %v201 = vld [vmem:[%s152 + $0xb0] sm:$0xff]
        %v202 = vld [vmem:[%s152 + $0xb8] sm:$0xff]
        %v203 = vld [vmem:[%s152 + $0xc0] sm:$0xff]
        %v204 = vld [vmem:[%s152 + $0xc8] sm:$0xff]
        %v205 = vld [vmem:[%s152 + $0xd0] sm:$0xff]
        %v206 = vld [vmem:[%s152 + $0xd8] sm:$0xff]
        %v207 = vld [vmem:[%s152 + $0xe0] sm:$0xff]
        %v208 = vld [vmem:[%s152 + $0xe8] sm:$0xff]
        %v209 = vld [vmem:[%s152 + $0xf0] sm:$0xff]
        %v210 = vld [vmem:[%s152 + $0xf8] sm:$0xff]
        %v211 = vld [vmem:[%s152 + $0x100] sm:$0xff]
        %v212 = vld [vmem:[%s152 + $0x108] sm:$0xff]
        %v213 = vld [vmem:[%s152 + $0x110] sm:$0xff]
        %v214 = vld [vmem:[%s152 + $0x118] sm:$0xff]
        %v215 = vld [vmem:[%s152 + $0x120] sm:$0xff]
        %v216 = vld [vmem:[%s152 + $0x128] sm:$0xff]
        %v217 = vld [vmem:[%s152 + $0x130] sm:$0xff]
        %v218 = vld [vmem:[%s152 + $0x138] sm:$0xff]
        %v219 = vld [vmem:[%s152 + $0x140] sm:$0xff]
        %v220 = vld [vmem:[%s152 + $0x148] sm:$0xff]
        %v221 = vld [vmem:[%s152 + $0x150] sm:$0xff]
        %v222 = vld [vmem:[%s152 + $0x158] sm:$0xff]
        %v223 = vld [vmem:[%s152 + $0x160] sm:$0xff]
        %v224 = vld [vmem:[%s152 + $0x168] sm:$0xff]
        %v225 = vld [vmem:[%s152 + $0x170] sm:$0xff]
        %v226 = vld [vmem:[%s152 + $0x178] sm:$0xff]
        %v227 = vld [vmem:[%s152 + $0x180] sm:$0xff]
        %v228 = vld [vmem:[%s152 + $0x188] sm:$0xff]
        %v229 = vld [vmem:[%s152 + $0x190] sm:$0xff]
        %v230 = vld [vmem:[%s152 + $0x198] sm:$0xff]
        %v231 = vld [vmem:[%s152 + $0x1a0] sm:$0xff]
        %v232 = vld [vmem:[%s152 + $0x1a8] sm:$0xff]
        %v233 = vld [vmem:[%s152 + $0x1b0] sm:$0xff]
        %v234 = vld [vmem:[%s152 + $0x1b8] sm:$0xff]
        %v235 = vld [vmem:[%s152 + $0x1c0] sm:$0xff]
        %v236 = vld [vmem:[%s152 + $0x1c8] sm:$0xff]
        %v237 = vld [vmem:[%s152 + $0x1d0] sm:$0xff]
        %v238 = vld [vmem:[%s152 + $0x1d8] sm:$0xff]
        %v239 = vld [vmem:[%s152 + $0x1e0] sm:$0xff]
        %v240 = vld [vmem:[%s152 + $0x1e8] sm:$0xff]
        %v241 = vld [vmem:[%s152 + $0x1f0] sm:$0xff]
        %v242 = vld [vmem:[%s152 + $0x1f8] sm:$0xff]
        %v243 = vld [vmem:[#allocation5] sm:$0xff]
        %v244 = vld [vmem:[#allocation5 + $0x8] sm:$0xff]
        %v245 = vld [vmem:[#allocation5 + $0x10] sm:$0xff]
        %v246 = vld [vmem:[#allocation5 + $0x18] sm:$0xff]
        %v247 = vld [vmem:[#allocation5 + $0x20] sm:$0xff]
        %v248 = vld [vmem:[#allocation5 + $0x28] sm:$0xff]
        %v249 = vld [vmem:[#allocation5 + $0x30] sm:$0xff]
        %v250 = vld [vmem:[#allocation5 + $0x38] sm:$0xff]
        %v251 = vld [vmem:[#allocation5 + $0x40] sm:$0xff]
        %v252 = vld [vmem:[#allocation5 + $0x48] sm:$0xff]
        %v253 = vld [vmem:[#allocation5 + $0x50] sm:$0xff]
        %v254 = vld [vmem:[#allocation5 + $0x58] sm:$0xff]
        %v255 = vld [vmem:[#allocation5 + $0x60] sm:$0xff]
        %v256 = vld [vmem:[#allocation5 + $0x68] sm:$0xff]
        %v257 = vld [vmem:[#allocation5 + $0x70] sm:$0xff]
        %v258 = vld [vmem:[#allocation5 + $0x78] sm:$0xff]
        %v259 = vld [vmem:[#allocation5 + $0x80] sm:$0xff]
        %v260 = vld [vmem:[#allocation5 + $0x88] sm:$0xff]
        %v261 = vld [vmem:[#allocation5 + $0x90] sm:$0xff]
        %v262 = vld [vmem:[#allocation5 + $0x98] sm:$0xff]
        %v263 = vld [vmem:[#allocation5 + $0xa0] sm:$0xff]
        %v264 = vld [vmem:[#allocation5 + $0xa8] sm:$0xff]
        %v265 = vld [vmem:[#allocation5 + $0xb0] sm:$0xff]
        %v266 = vld [vmem:[#allocation5 + $0xb8] sm:$0xff]
        %v267 = vld [vmem:[#allocation5 + $0xc0] sm:$0xff]
        %v268 = vld [vmem:[#allocation5 + $0xc8] sm:$0xff]
        %v269 = vld [vmem:[#allocation5 + $0xd0] sm:$0xff]
        %v270 = vld [vmem:[#allocation5 + $0xd8] sm:$0xff]
        %v271 = vld [vmem:[#allocation5 + $0xe0] sm:$0xff]
        %v272 = vld [vmem:[#allocation5 + $0xe8] sm:$0xff]
        %v273 = vld [vmem:[#allocation5 + $0xf0] sm:$0xff]
        %v274 = vld [vmem:[#allocation5 + $0xf8] sm:$0xff]
        %275 = vmatprep.subr.mxu0 %v274
        %276 = vmatpush1.msra.mxu0 %v273
        %277 = vmatprep.subr.mxu0 %v272
        %278 = vmatpush1.msra.mxu0 %v271
        %279 = vmatprep.subr.mxu0 %v270
        %280 = vmatpush1.msra.mxu0 %v269
        %281 = vmatprep.subr.mxu0 %v268
        %282 = vmatpush1.msra.mxu0 %v267
        %283 = vmatprep.subr.mxu0 %v266
        %284 = vmatpush1.msra.mxu0 %v265
        %285 = vmatprep.subr.mxu0 %v264
        %286 = vmatpush1.msra.mxu0 %v263
        %287 = vmatprep.subr.mxu0 %v262
        %288 = vmatpush1.msra.mxu0 %v261
        %289 = vmatprep.subr.mxu0 %v260
        %290 = vmatpush1.msra.mxu0 %v259
        %291 = vmatprep.subr.mxu0 %v258
        %292 = vmatpush1.msra.mxu0 %v257
        %293 = vmatprep.subr.mxu0 %v256
        %294 = vmatpush1.msra.mxu0 %v255
        %295 = vmatprep.subr.mxu0 %v254
        %296 = vmatpush1.msra.mxu0 %v253
        %297 = vmatprep.subr.mxu0 %v252
        %298 = vmatpush1.msra.mxu0 %v251
        %299 = vmatprep.subr.mxu0 %v250
        %300 = vmatpush1.msra.mxu0 %v249
        %301 = vmatprep.subr.mxu0 %v248
        %302 = vmatpush1.msra.mxu0 %v247
        %303 = vmatprep.subr.mxu0 %v246
        %304 = vmatpush1.msra.mxu0 %v245
        %305 = vmatprep.subr.mxu0 %v244
        %306 = vmatpush1.msra.mxu0 %v243
        %307 = vmatprep.subr.mxu0 0.0
        %308 = vmatpush2.msra.mxu0 0.0
        %309 = vmatprep.subr.mxu0 0.0
        %310 = vmatpush2.msra.mxu0 0.0
        %311 = vmatprep.subr.mxu0 0.0
        %312 = vmatpush2.msra.mxu0 0.0
        %313 = vmatprep.subr.mxu0 0.0
        %314 = vmatpush2.msra.mxu0 0.0
        %315 = vmatprep.subr.mxu0 0.0
        %316 = vmatpush2.msra.mxu0 0.0
        %317 = vmatprep.subr.mxu0 0.0
        %318 = vmatpush2.msra.mxu0 0.0
        %319 = vmatprep.subr.mxu0 0.0
        %320 = vmatpush2.msra.mxu0 0.0
        %321 = vmatprep.subr.mxu0 0.0
        %322 = vmatpush2.msra.mxu0 0.0
        %323 = vmatprep.subr.mxu0 0.0
        %324 = vmatpush2.msra.mxu0 0.0
        %325 = vmatprep.subr.mxu0 0.0
        %326 = vmatpush2.msra.mxu0 0.0
        %327 = vmatprep.subr.mxu0 0.0
        %328 = vmatpush2.msra.mxu0 0.0
        %329 = vmatprep.subr.mxu0 0.0
        %330 = vmatpush2.msra.mxu0 0.0
        %331 = vmatprep.subr.mxu0 0.0
        %332 = vmatpush2.msra.mxu0 0.0
        %333 = vmatprep.subr.mxu0 0.0
        %334 = vmatpush2.msra.mxu0 0.0
        %335 = vmatprep.subr.mxu0 0.0
        %336 = vmatpush2.msra.mxu0 0.0
        %337 = vmatprep.subr.mxu0 0.0
        %338 = vmatpush2.msra.mxu0 0.0
        %339 = vmatprep.mubr.f32.mxu0 0.0
        %340 = vmatmul.mubr.f32.gmra.mxu0 %v179
        %v341 = vpop.f32.mrf.mxu0
        %v342 = vadd.f32 0.0, %v341
        %v343 = vpop.f32.mrf.mxu0
        %v344 = vadd.f32 0.0, %v343
        %345 = vmatprep.mubr.f32.mxu0 0.0
        %346 = vmatmul.mubr.f32.gmra.mxu0 %v180
        %v347 = vpop.f32.mrf.mxu0
        %v348 = vadd.f32 0.0, %v347
        %v349 = vpop.f32.mrf.mxu0
        %v350 = vadd.f32 0.0, %v349
        %351 = vmatprep.mubr.f32.mxu0 0.0
        %352 = vmatmul.mubr.f32.gmra.mxu0 %v181
        %v353 = vpop.f32.mrf.mxu0
        %v354 = vadd.f32 0.0, %v353
        %v355 = vpop.f32.mrf.mxu0
        %v356 = vadd.f32 0.0, %v355
        %357 = vmatprep.mubr.f32.mxu0 0.0
        %358 = vmatmul.mubr.f32.gmra.mxu0 %v182
        %v359 = vpop.f32.mrf.mxu0
        %v360 = vadd.f32 0.0, %v359
        %v361 = vpop.f32.mrf.mxu0
        %v362 = vadd.f32 0.0, %v361
        %363 = vmatprep.mubr.f32.mxu0 0.0
        %364 = vmatmul.mubr.f32.gmra.mxu0 %v183
        %v365 = vpop.f32.mrf.mxu0
        %v366 = vadd.f32 0.0, %v365
        %v367 = vpop.f32.mrf.mxu0
        %v368 = vadd.f32 0.0, %v367
        %369 = vmatprep.mubr.f32.mxu0 0.0
        %370 = vmatmul.mubr.f32.gmra.mxu0 %v184
        %v371 = vpop.f32.mrf.mxu0
        %v372 = vadd.f32 0.0, %v371
        %v373 = vpop.f32.mrf.mxu0
        %v374 = vadd.f32 0.0, %v373
        %375 = vmatprep.mubr.f32.mxu0 0.0
        %376 = vmatmul.mubr.f32.gmra.mxu0 %v185
        %v377 = vpop.f32.mrf.mxu0
        %v378 = vadd.f32 0.0, %v377
        %v379 = vpop.f32.mrf.mxu0
        %v380 = vadd.f32 0.0, %v379
        %381 = vmatprep.mubr.f32.mxu0 0.0
        %382 = vmatmul.mubr.f32.gmra.mxu0 %v186
        %v383 = vpop.f32.mrf.mxu0
        %v384 = vadd.f32 0.0, %v383
        %v385 = vpop.f32.mrf.mxu0
        %v386 = vadd.f32 0.0, %v385
        %387 = vmatprep.mubr.f32.mxu0 0.0
        %388 = vmatmul.mubr.f32.gmra.mxu0 %v187
        %v389 = vpop.f32.mrf.mxu0
        %v390 = vadd.f32 0.0, %v389
        %v391 = vpop.f32.mrf.mxu0
        %v392 = vadd.f32 0.0, %v391
        %393 = vmatprep.mubr.f32.mxu0 0.0
        %394 = vmatmul.mubr.f32.gmra.mxu0 %v188
        %v395 = vpop.f32.mrf.mxu0
        %v396 = vadd.f32 0.0, %v395
        %v397 = vpop.f32.mrf.mxu0
        %v398 = vadd.f32 0.0, %v397
        %399 = vmatprep.mubr.f32.mxu0 0.0
        %400 = vmatmul.mubr.f32.gmra.mxu0 %v189
        %v401 = vpop.f32.mrf.mxu0
        %v402 = vadd.f32 0.0, %v401
        %v403 = vpop.f32.mrf.mxu0
        %v404 = vadd.f32 0.0, %v403
        %405 = vmatprep.mubr.f32.mxu0 0.0
        %406 = vmatmul.mubr.f32.gmra.mxu0 %v190
        %v407 = vpop.f32.mrf.mxu0
        %v408 = vadd.f32 0.0, %v407
        %v409 = vpop.f32.mrf.mxu0
        %v410 = vadd.f32 0.0, %v409
        %411 = vmatprep.mubr.f32.mxu0 0.0
        %412 = vmatmul.mubr.f32.gmra.mxu0 %v191
        %v413 = vpop.f32.mrf.mxu0
        %v414 = vadd.f32 0.0, %v413
        %v415 = vpop.f32.mrf.mxu0
        %v416 = vadd.f32 0.0, %v415
        %417 = vmatprep.mubr.f32.mxu0 0.0
        %418 = vmatmul.mubr.f32.gmra.mxu0 %v192
        %v419 = vpop.f32.mrf.mxu0
        %v420 = vadd.f32 0.0, %v419
        %v421 = vpop.f32.mrf.mxu0
        %v422 = vadd.f32 0.0, %v421
        %423 = vmatprep.mubr.f32.mxu0 0.0
        %424 = vmatmul.mubr.f32.gmra.mxu0 %v193
        %v425 = vpop.f32.mrf.mxu0
        %v426 = vadd.f32 0.0, %v425
        %v427 = vpop.f32.mrf.mxu0
        %v428 = vadd.f32 0.0, %v427
        %429 = vmatprep.mubr.f32.mxu0 0.0
        %430 = vmatmul.mubr.f32.gmra.mxu0 %v194
        %v431 = vpop.f32.mrf.mxu0
        %v432 = vadd.f32 0.0, %v431
        %v433 = vpop.f32.mrf.mxu0
        %v434 = vadd.f32 0.0, %v433
        %435 = vmatprep.mubr.f32.mxu0 0.0
        %436 = vmatmul.mubr.f32.gmra.mxu0 %v195
        %v437 = vpop.f32.mrf.mxu0
        %v438 = vadd.f32 0.0, %v437
        %v439 = vpop.f32.mrf.mxu0
        %v440 = vadd.f32 0.0, %v439
        %441 = vmatprep.mubr.f32.mxu0 0.0
        %442 = vmatmul.mubr.f32.gmra.mxu0 %v196
        %v443 = vpop.f32.mrf.mxu0
        %v444 = vadd.f32 0.0, %v443
        %v445 = vpop.f32.mrf.mxu0
        %v446 = vadd.f32 0.0, %v445
        %447 = vmatprep.mubr.f32.mxu0 0.0
        %448 = vmatmul.mubr.f32.gmra.mxu0 %v197
        %v449 = vpop.f32.mrf.mxu0
        %v450 = vadd.f32 0.0, %v449
        %v451 = vpop.f32.mrf.mxu0
        %v452 = vadd.f32 0.0, %v451
        %453 = vmatprep.mubr.f32.mxu0 0.0
        %454 = vmatmul.mubr.f32.gmra.mxu0 %v198
        %v455 = vpop.f32.mrf.mxu0
        %v456 = vadd.f32 0.0, %v455
        %v457 = vpop.f32.mrf.mxu0
        %v458 = vadd.f32 0.0, %v457
        %459 = vmatprep.mubr.f32.mxu0 0.0
        %460 = vmatmul.mubr.f32.gmra.mxu0 %v199
        %v461 = vpop.f32.mrf.mxu0
        %v462 = vadd.f32 0.0, %v461
        %v463 = vpop.f32.mrf.mxu0
        %v464 = vadd.f32 0.0, %v463
        %465 = vmatprep.mubr.f32.mxu0 0.0
        %466 = vmatmul.mubr.f32.gmra.mxu0 %v200
        %v467 = vpop.f32.mrf.mxu0
        %v468 = vadd.f32 0.0, %v467
        %v469 = vpop.f32.mrf.mxu0
        %v470 = vadd.f32 0.0, %v469
        %471 = vmatprep.mubr.f32.mxu0 0.0
        %472 = vmatmul.mubr.f32.gmra.mxu0 %v201
        %v473 = vpop.f32.mrf.mxu0
        %v474 = vadd.f32 0.0, %v473
        %v475 = vpop.f32.mrf.mxu0
        %v476 = vadd.f32 0.0, %v475
        %477 = vmatprep.mubr.f32.mxu0 0.0
        %478 = vmatmul.mubr.f32.gmra.mxu0 %v202
        %v479 = vpop.f32.mrf.mxu0
        %v480 = vadd.f32 0.0, %v479
        %v481 = vpop.f32.mrf.mxu0
        %v482 = vadd.f32 0.0, %v481
        %483 = vmatprep.mubr.f32.mxu0 0.0
        %484 = vmatmul.mubr.f32.gmra.mxu0 %v203
        %v485 = vpop.f32.mrf.mxu0
        %v486 = vadd.f32 0.0, %v485
        %v487 = vpop.f32.mrf.mxu0
        %v488 = vadd.f32 0.0, %v487
        %489 = vmatprep.mubr.f32.mxu0 0.0
        %490 = vmatmul.mubr.f32.gmra.mxu0 %v204
        %v491 = vpop.f32.mrf.mxu0
        %v492 = vadd.f32 0.0, %v491
        %v493 = vpop.f32.mrf.mxu0
        %v494 = vadd.f32 0.0, %v493
        %495 = vmatprep.mubr.f32.mxu0 0.0
        %496 = vmatmul.mubr.f32.gmra.mxu0 %v205
        %v497 = vpop.f32.mrf.mxu0
        %v498 = vadd.f32 0.0, %v497
        %v499 = vpop.f32.mrf.mxu0
        %v500 = vadd.f32 0.0, %v499
        %501 = vmatprep.mubr.f32.mxu0 0.0
        %502 = vmatmul.mubr.f32.gmra.mxu0 %v206
        %v503 = vpop.f32.mrf.mxu0
        %v504 = vadd.f32 0.0, %v503
        %v505 = vpop.f32.mrf.mxu0
        %v506 = vadd.f32 0.0, %v505
        %507 = vmatprep.mubr.f32.mxu0 0.0
        %508 = vmatmul.mubr.f32.gmra.mxu0 %v207
        %v509 = vpop.f32.mrf.mxu0
        %v510 = vadd.f32 0.0, %v509
        %v511 = vpop.f32.mrf.mxu0
        %v512 = vadd.f32 0.0, %v511
        %513 = vmatprep.mubr.f32.mxu0 0.0
        %514 = vmatmul.mubr.f32.gmra.mxu0 %v208
        %v515 = vpop.f32.mrf.mxu0
        %v516 = vadd.f32 0.0, %v515
        %v517 = vpop.f32.mrf.mxu0
        %v518 = vadd.f32 0.0, %v517
        %519 = vmatprep.mubr.f32.mxu0 0.0
        %520 = vmatmul.mubr.f32.gmra.mxu0 %v209
        %v521 = vpop.f32.mrf.mxu0
        %v522 = vadd.f32 0.0, %v521
        %v523 = vpop.f32.mrf.mxu0
        %v524 = vadd.f32 0.0, %v523
        %525 = vmatprep.mubr.f32.mxu0 0.0
        %526 = vmatmul.mubr.f32.gmra.mxu0 %v210
        %v527 = vpop.f32.mrf.mxu0
        %v528 = vadd.f32 0.0, %v527
        %v529 = vpop.f32.mrf.mxu0
        %v530 = vadd.f32 0.0, %v529
        %531 = vmatprep.mubr.f32.mxu0 0.0
        %532 = vmatmul.mubr.f32.gmra.mxu0 %v211
        %v533 = vpop.f32.mrf.mxu0
        %v534 = vadd.f32 0.0, %v533
        %v535 = vpop.f32.mrf.mxu0
        %v536 = vadd.f32 0.0, %v535
        %537 = vmatprep.mubr.f32.mxu0 0.0
        %538 = vmatmul.mubr.f32.gmra.mxu0 %v212
        %v539 = vpop.f32.mrf.mxu0
        %v540 = vadd.f32 0.0, %v539
        %v541 = vpop.f32.mrf.mxu0
        %v542 = vadd.f32 0.0, %v541
        %543 = vmatprep.mubr.f32.mxu0 0.0
        %544 = vmatmul.mubr.f32.gmra.mxu0 %v213
        %v545 = vpop.f32.mrf.mxu0
        %v546 = vadd.f32 0.0, %v545
        %v547 = vpop.f32.mrf.mxu0
        %v548 = vadd.f32 0.0, %v547
        %549 = vmatprep.mubr.f32.mxu0 0.0
        %550 = vmatmul.mubr.f32.gmra.mxu0 %v214
        %v551 = vpop.f32.mrf.mxu0
        %v552 = vadd.f32 0.0, %v551
        %v553 = vpop.f32.mrf.mxu0
        %v554 = vadd.f32 0.0, %v553
        %555 = vmatprep.mubr.f32.mxu0 0.0
        %556 = vmatmul.mubr.f32.gmra.mxu0 %v215
        %v557 = vpop.f32.mrf.mxu0
        %v558 = vadd.f32 0.0, %v557
        %v559 = vpop.f32.mrf.mxu0
        %v560 = vadd.f32 0.0, %v559
        %561 = vmatprep.mubr.f32.mxu0 0.0
        %562 = vmatmul.mubr.f32.gmra.mxu0 %v216
        %v563 = vpop.f32.mrf.mxu0
        %v564 = vadd.f32 0.0, %v563
        %v565 = vpop.f32.mrf.mxu0
        %v566 = vadd.f32 0.0, %v565
        %567 = vmatprep.mubr.f32.mxu0 0.0
        %568 = vmatmul.mubr.f32.gmra.mxu0 %v217
        %v569 = vpop.f32.mrf.mxu0
        %v570 = vadd.f32 0.0, %v569
        %v571 = vpop.f32.mrf.mxu0
        %v572 = vadd.f32 0.0, %v571
        %573 = vmatprep.mubr.f32.mxu0 0.0
        %574 = vmatmul.mubr.f32.gmra.mxu0 %v218
        %v575 = vpop.f32.mrf.mxu0
        %v576 = vadd.f32 0.0, %v575
        %v577 = vpop.f32.mrf.mxu0
        %v578 = vadd.f32 0.0, %v577
        %579 = vmatprep.mubr.f32.mxu0 0.0
        %580 = vmatmul.mubr.f32.gmra.mxu0 %v219
        %v581 = vpop.f32.mrf.mxu0
        %v582 = vadd.f32 0.0, %v581
        %v583 = vpop.f32.mrf.mxu0
        %v584 = vadd.f32 0.0, %v583
        %585 = vmatprep.mubr.f32.mxu0 0.0
        %586 = vmatmul.mubr.f32.gmra.mxu0 %v220
        %v587 = vpop.f32.mrf.mxu0
        %v588 = vadd.f32 0.0, %v587
        %v589 = vpop.f32.mrf.mxu0
        %v590 = vadd.f32 0.0, %v589
        %591 = vmatprep.mubr.f32.mxu0 0.0
        %592 = vmatmul.mubr.f32.gmra.mxu0 %v221
        %v593 = vpop.f32.mrf.mxu0
        %v594 = vadd.f32 0.0, %v593
        %v595 = vpop.f32.mrf.mxu0
        %v596 = vadd.f32 0.0, %v595
        %597 = vmatprep.mubr.f32.mxu0 0.0
        %598 = vmatmul.mubr.f32.gmra.mxu0 %v222
        %v599 = vpop.f32.mrf.mxu0
        %v600 = vadd.f32 0.0, %v599
        %v601 = vpop.f32.mrf.mxu0
        %v602 = vadd.f32 0.0, %v601
        %603 = vmatprep.mubr.f32.mxu0 0.0
        %604 = vmatmul.mubr.f32.gmra.mxu0 %v223
        %v605 = vpop.f32.mrf.mxu0
        %v606 = vadd.f32 0.0, %v605
        %v607 = vpop.f32.mrf.mxu0
        %v608 = vadd.f32 0.0, %v607
        %609 = vmatprep.mubr.f32.mxu0 0.0
        %610 = vmatmul.mubr.f32.gmra.mxu0 %v224
        %v611 = vpop.f32.mrf.mxu0
        %v612 = vadd.f32 0.0, %v611
        %v613 = vpop.f32.mrf.mxu0
        %v614 = vadd.f32 0.0, %v613
        %615 = vmatprep.mubr.f32.mxu0 0.0
        %616 = vmatmul.mubr.f32.gmra.mxu0 %v225
        %v617 = vpop.f32.mrf.mxu0
        %v618 = vadd.f32 0.0, %v617
        %v619 = vpop.f32.mrf.mxu0
        %v620 = vadd.f32 0.0, %v619
        %621 = vmatprep.mubr.f32.mxu0 0.0
        %622 = vmatmul.mubr.f32.gmra.mxu0 %v226
        %v623 = vpop.f32.mrf.mxu0
        %v624 = vadd.f32 0.0, %v623
        %v625 = vpop.f32.mrf.mxu0
        %v626 = vadd.f32 0.0, %v625
        %627 = vmatprep.mubr.f32.mxu0 0.0
        %628 = vmatmul.mubr.f32.gmra.mxu0 %v227
        %v629 = vpop.f32.mrf.mxu0
        %v630 = vadd.f32 0.0, %v629
        %v631 = vpop.f32.mrf.mxu0
        %v632 = vadd.f32 0.0, %v631
        %633 = vmatprep.mubr.f32.mxu0 0.0
        %634 = vmatmul.mubr.f32.gmra.mxu0 %v228
        %v635 = vpop.f32.mrf.mxu0
        %v636 = vadd.f32 0.0, %v635
        %v637 = vpop.f32.mrf.mxu0
        %v638 = vadd.f32 0.0, %v637
        %639 = vmatprep.mubr.f32.mxu0 0.0
        %640 = vmatmul.mubr.f32.gmra.mxu0 %v229
        %v641 = vpop.f32.mrf.mxu0
        %v642 = vadd.f32 0.0, %v641
        %v643 = vpop.f32.mrf.mxu0
        %v644 = vadd.f32 0.0, %v643
        %645 = vmatprep.mubr.f32.mxu0 0.0
        %646 = vmatmul.mubr.f32.gmra.mxu0 %v230
        %v647 = vpop.f32.mrf.mxu0
        %v648 = vadd.f32 0.0, %v647
        %v649 = vpop.f32.mrf.mxu0
        %v650 = vadd.f32 0.0, %v649
        %651 = vmatprep.mubr.f32.mxu0 0.0
        %652 = vmatmul.mubr.f32.gmra.mxu0 %v231
        %v653 = vpop.f32.mrf.mxu0
        %v654 = vadd.f32 0.0, %v653
        %v655 = vpop.f32.mrf.mxu0
        %v656 = vadd.f32 0.0, %v655
        %657 = vmatprep.mubr.f32.mxu0 0.0
        %658 = vmatmul.mubr.f32.gmra.mxu0 %v232
        %v659 = vpop.f32.mrf.mxu0
        %v660 = vadd.f32 0.0, %v659
        %v661 = vpop.f32.mrf.mxu0
        %v662 = vadd.f32 0.0, %v661
        %663 = vmatprep.mubr.f32.mxu0 0.0
        %664 = vmatmul.mubr.f32.gmra.mxu0 %v233
        %v665 = vpop.f32.mrf.mxu0
        %v666 = vadd.f32 0.0, %v665
        %v667 = vpop.f32.mrf.mxu0
        %v668 = vadd.f32 0.0, %v667
        %669 = vmatprep.mubr.f32.mxu0 0.0
        %670 = vmatmul.mubr.f32.gmra.mxu0 %v234
        %v671 = vpop.f32.mrf.mxu0
        %v672 = vadd.f32 0.0, %v671
        %v673 = vpop.f32.mrf.mxu0
        %v674 = vadd.f32 0.0, %v673
        %675 = vmatprep.mubr.f32.mxu0 0.0
        %676 = vmatmul.mubr.f32.gmra.mxu0 %v235
        %v677 = vpop.f32.mrf.mxu0
        %v678 = vadd.f32 0.0, %v677
        %v679 = vpop.f32.mrf.mxu0
        %v680 = vadd.f32 0.0, %v679
        %681 = vmatprep.mubr.f32.mxu0 0.0
        %682 = vmatmul.mubr.f32.gmra.mxu0 %v236
        %v683 = vpop.f32.mrf.mxu0
        %v684 = vadd.f32 0.0, %v683
        %v685 = vpop.f32.mrf.mxu0
        %v686 = vadd.f32 0.0, %v685
        %687 = vmatprep.mubr.f32.mxu0 0.0
        %688 = vmatmul.mubr.f32.gmra.mxu0 %v237
        %v689 = vpop.f32.mrf.mxu0
        %v690 = vadd.f32 0.0, %v689
        %v691 = vpop.f32.mrf.mxu0
        %v692 = vadd.f32 0.0, %v691
        %693 = vmatprep.mubr.f32.mxu0 0.0
        %694 = vmatmul.mubr.f32.gmra.mxu0 %v238
        %v695 = vpop.f32.mrf.mxu0
        %v696 = vadd.f32 0.0, %v695
        %v697 = vpop.f32.mrf.mxu0
        %v698 = vadd.f32 0.0, %v697
        %699 = vmatprep.mubr.f32.mxu0 0.0
        %700 = vmatmul.mubr.f32.gmra.mxu0 %v239
        %v701 = vpop.f32.mrf.mxu0
        %v702 = vadd.f32 0.0, %v701
        %v703 = vpop.f32.mrf.mxu0
        %v704 = vadd.f32 0.0, %v703
        %705 = vmatprep.mubr.f32.mxu0 0.0
        %706 = vmatmul.mubr.f32.gmra.mxu0 %v240
        %v707 = vpop.f32.mrf.mxu0
        %v708 = vadd.f32 0.0, %v707
        %v709 = vpop.f32.mrf.mxu0
        %v710 = vadd.f32 0.0, %v709
        %711 = vmatprep.mubr.f32.mxu0 0.0
        %712 = vmatmul.mubr.f32.gmra.mxu0 %v241
        %v713 = vpop.f32.mrf.mxu0
        %v714 = vadd.f32 0.0, %v713
        %v715 = vpop.f32.mrf.mxu0
        %v716 = vadd.f32 0.0, %v715
        %717 = vmatprep.mubr.f32.mxu0 0.0
        %718 = vmatmul.mubr.f32.gmra.mxu0 %v242
        %v719 = vpop.f32.mrf.mxu0
        %v720 = vadd.f32 0.0, %v719
        %v721 = vpop.f32.mrf.mxu0
        %v722 = vadd.f32 0.0, %v721
        %723 = vdwg.mxu0
        %724 = vst [vmem:[%s176] sm:$0xff] %v342
        %725 = vst [vmem:[%s176 + $0x8] sm:$0xff] %v344
        %726 = vst [vmem:[%s176 + $0x10] sm:$0xff] %v348
        %727 = vst [vmem:[%s176 + $0x18] sm:$0xff] %v350
        %728 = vst [vmem:[%s176 + $0x20] sm:$0xff] %v354
        %729 = vst [vmem:[%s176 + $0x28] sm:$0xff] %v356
        %730 = vst [vmem:[%s176 + $0x30] sm:$0xff] %v360
        %731 = vst [vmem:[%s176 + $0x38] sm:$0xff] %v362
        %732 = vst [vmem:[%s176 + $0x40] sm:$0xff] %v366
        %733 = vst [vmem:[%s176 + $0x48] sm:$0xff] %v368
        %734 = vst [vmem:[%s176 + $0x50] sm:$0xff] %v372
        %735 = vst [vmem:[%s176 + $0x58] sm:$0xff] %v374
        %736 = vst [vmem:[%s176 + $0x60] sm:$0xff] %v378
        %737 = vst [vmem:[%s176 + $0x68] sm:$0xff] %v380
        %738 = vst [vmem:[%s176 + $0x70] sm:$0xff] %v384
        %739 = vst [vmem:[%s176 + $0x78] sm:$0xff] %v386
        %740 = vst [vmem:[%s176 + $0x80] sm:$0xff] %v390
        %741 = vst [vmem:[%s176 + $0x88] sm:$0xff] %v392
        %742 = vst [vmem:[%s176 + $0x90] sm:$0xff] %v396
        %743 = vst [vmem:[%s176 + $0x98] sm:$0xff] %v398
        %744 = vst [vmem:[%s176 + $0xa0] sm:$0xff] %v402
        %745 = vst [vmem:[%s176 + $0xa8] sm:$0xff] %v404
        %746 = vst [vmem:[%s176 + $0xb0] sm:$0xff] %v408
        %747 = vst [vmem:[%s176 + $0xb8] sm:$0xff] %v410
        %748 = vst [vmem:[%s176 + $0xc0] sm:$0xff] %v414
        %749 = vst [vmem:[%s176 + $0xc8] sm:$0xff] %v416
        %750 = vst [vmem:[%s176 + $0xd0] sm:$0xff] %v420
        %751 = vst [vmem:[%s176 + $0xd8] sm:$0xff] %v422
        %752 = vst [vmem:[%s176 + $0xe0] sm:$0xff] %v426
        %753 = vst [vmem:[%s176 + $0xe8] sm:$0xff] %v428
        %754 = vst [vmem:[%s176 + $0xf0] sm:$0xff] %v432
        %755 = vst [vmem:[%s176 + $0xf8] sm:$0xff] %v434
        %756 = vst [vmem:[%s176 + $0x100] sm:$0xff] %v438
        %757 = vst [vmem:[%s176 + $0x108] sm:$0xff] %v440
        %758 = vst [vmem:[%s176 + $0x110] sm:$0xff] %v444
        %759 = vst [vmem:[%s176 + $0x118] sm:$0xff] %v446
        %760 = vst [vmem:[%s176 + $0x120] sm:$0xff] %v450
        %761 = vst [vmem:[%s176 + $0x128] sm:$0xff] %v452
        %762 = vst [vmem:[%s176 + $0x130] sm:$0xff] %v456
        %763 = vst [vmem:[%s176 + $0x138] sm:$0xff] %v458
        %764 = vst [vmem:[%s176 + $0x140] sm:$0xff] %v462
        %765 = vst [vmem:[%s176 + $0x148] sm:$0xff] %v464
        %766 = vst [vmem:[%s176 + $0x150] sm:$0xff] %v468
        %767 = vst [vmem:[%s176 + $0x158] sm:$0xff] %v470
        %768 = vst [vmem:[%s176 + $0x160] sm:$0xff] %v474
        %769 = vst [vmem:[%s176 + $0x168] sm:$0xff] %v476
        %770 = vst [vmem:[%s176 + $0x170] sm:$0xff] %v480
        %771 = vst [vmem:[%s176 + $0x178] sm:$0xff] %v482
        %772 = vst [vmem:[%s176 + $0x180] sm:$0xff] %v486
        %773 = vst [vmem:[%s176 + $0x188] sm:$0xff] %v488
        %774 = vst [vmem:[%s176 + $0x190] sm:$0xff] %v492
        %775 = vst [vmem:[%s176 + $0x198] sm:$0xff] %v494
        %776 = vst [vmem:[%s176 + $0x1a0] sm:$0xff] %v498
        %777 = vst [vmem:[%s176 + $0x1a8] sm:$0xff] %v500
        %778 = vst [vmem:[%s176 + $0x1b0] sm:$0xff] %v504
        %779 = vst [vmem:[%s176 + $0x1b8] sm:$0xff] %v506
        %780 = vst [vmem:[%s176 + $0x1c0] sm:$0xff] %v510
        %781 = vst [vmem:[%s176 + $0x1c8] sm:$0xff] %v512
        %782 = vst [vmem:[%s176 + $0x1d0] sm:$0xff] %v516
        %783 = vst [vmem:[%s176 + $0x1d8] sm:$0xff] %v518
        %784 = vst [vmem:[%s176 + $0x1e0] sm:$0xff] %v522
        %785 = vst [vmem:[%s176 + $0x1e8] sm:$0xff] %v524
        %786 = vst [vmem:[%s176 + $0x1f0] sm:$0xff] %v528
        %787 = vst [vmem:[%s176 + $0x1f8] sm:$0xff] %v530
        %788 = vst [vmem:[%s176 + $0x200] sm:$0xff] %v534
        %789 = vst [vmem:[%s176 + $0x208] sm:$0xff] %v536
        %790 = vst [vmem:[%s176 + $0x210] sm:$0xff] %v540
        %791 = vst [vmem:[%s176 + $0x218] sm:$0xff] %v542
        %792 = vst [vmem:[%s176 + $0x220] sm:$0xff] %v546
        %793 = vst [vmem:[%s176 + $0x228] sm:$0xff] %v548
        %794 = vst [vmem:[%s176 + $0x230] sm:$0xff] %v552
        %795 = vst [vmem:[%s176 + $0x238] sm:$0xff] %v554
        %796 = vst [vmem:[%s176 + $0x240] sm:$0xff] %v558
        %797 = vst [vmem:[%s176 + $0x248] sm:$0xff] %v560
        %798 = vst [vmem:[%s176 + $0x250] sm:$0xff] %v564
        %799 = vst [vmem:[%s176 + $0x258] sm:$0xff] %v566
        %800 = vst [vmem:[%s176 + $0x260] sm:$0xff] %v570
        %801 = vst [vmem:[%s176 + $0x268] sm:$0xff] %v572
        %802 = vst [vmem:[%s176 + $0x270] sm:$0xff] %v576
        %803 = vst [vmem:[%s176 + $0x278] sm:$0xff] %v578
        %804 = vst [vmem:[%s176 + $0x280] sm:$0xff] %v582
        %805 = vst [vmem:[%s176 + $0x288] sm:$0xff] %v584
        %806 = vst [vmem:[%s176 + $0x290] sm:$0xff] %v588
        %807 = vst [vmem:[%s176 + $0x298] sm:$0xff] %v590
        %808 = vst [vmem:[%s176 + $0x2a0] sm:$0xff] %v594
        %809 = vst [vmem:[%s176 + $0x2a8] sm:$0xff] %v596
        %810 = vst [vmem:[%s176 + $0x2b0] sm:$0xff] %v600
        %811 = vst [vmem:[%s176 + $0x2b8] sm:$0xff] %v602
        %812 = vst [vmem:[%s176 + $0x2c0] sm:$0xff] %v606
        %813 = vst [vmem:[%s176 + $0x2c8] sm:$0xff] %v608
        %814 = vst [vmem:[%s176 + $0x2d0] sm:$0xff] %v612
        %815 = vst [vmem:[%s176 + $0x2d8] sm:$0xff] %v614
        %816 = vst [vmem:[%s176 + $0x2e0] sm:$0xff] %v618
        %817 = vst [vmem:[%s176 + $0x2e8] sm:$0xff] %v620
        %818 = vst [vmem:[%s176 + $0x2f0] sm:$0xff] %v624
        %819 = vst [vmem:[%s176 + $0x2f8] sm:$0xff] %v626
        %820 = vst [vmem:[%s176 + $0x300] sm:$0xff] %v630
        %821 = vst [vmem:[%s176 + $0x308] sm:$0xff] %v632
        %822 = vst [vmem:[%s176 + $0x310] sm:$0xff] %v636
        %823 = vst [vmem:[%s176 + $0x318] sm:$0xff] %v638
        %824 = vst [vmem:[%s176 + $0x320] sm:$0xff] %v642
        %825 = vst [vmem:[%s176 + $0x328] sm:$0xff] %v644
        %826 = vst [vmem:[%s176 + $0x330] sm:$0xff] %v648
        %827 = vst [vmem:[%s176 + $0x338] sm:$0xff] %v650
        %828 = vst [vmem:[%s176 + $0x340] sm:$0xff] %v654
        %829 = vst [vmem:[%s176 + $0x348] sm:$0xff] %v656
        %830 = vst [vmem:[%s176 + $0x350] sm:$0xff] %v660
        %831 = vst [vmem:[%s176 + $0x358] sm:$0xff] %v662
        %832 = vst [vmem:[%s176 + $0x360] sm:$0xff] %v666
        %833 = vst [vmem:[%s176 + $0x368] sm:$0xff] %v668
        %834 = vst [vmem:[%s176 + $0x370] sm:$0xff] %v672
        %835 = vst [vmem:[%s176 + $0x378] sm:$0xff] %v674
        %836 = vst [vmem:[%s176 + $0x380] sm:$0xff] %v678
        %837 = vst [vmem:[%s176 + $0x388] sm:$0xff] %v680
        %838 = vst [vmem:[%s176 + $0x390] sm:$0xff] %v684
        %839 = vst [vmem:[%s176 + $0x398] sm:$0xff] %v686
        %840 = vst [vmem:[%s176 + $0x3a0] sm:$0xff] %v690
        %841 = vst [vmem:[%s176 + $0x3a8] sm:$0xff] %v692
        %842 = vst [vmem:[%s176 + $0x3b0] sm:$0xff] %v696
        %843 = vst [vmem:[%s176 + $0x3b8] sm:$0xff] %v698
        %844 = vst [vmem:[%s176 + $0x3c0] sm:$0xff] %v702
        %845 = vst [vmem:[%s176 + $0x3c8] sm:$0xff] %v704
        %846 = vst [vmem:[%s176 + $0x3d0] sm:$0xff] %v708
        %847 = vst [vmem:[%s176 + $0x3d8] sm:$0xff] %v710
        %848 = vst [vmem:[%s176 + $0x3e0] sm:$0xff] %v714
        %849 = vst [vmem:[%s176 + $0x3e8] sm:$0xff] %v716
        %850 = vst [vmem:[%s176 + $0x3f0] sm:$0xff] %v720
        %851 = vst [vmem:[%s176 + $0x3f8] sm:$0xff] %v722
        %s852 = sand.u32 %s75, 1
        %s853 = scalar_lea.sflag [#allocation4], %s852
        %s854 = sand.u32 %s75, 1
        %s855 = smul.addr %s854, 1024
        %s856 = scalar_lea.vmem [#allocation7], %s855
        // Predicated region
        $region37: #{tpu_custom_call.1} parent=27 // pred_check
          %p857 = pneg %p85
        $region38: #{tpu_custom_call.1} parent=27 // pred_check_branch
          %859 = sbr.rel (%p857) target = $region40
        $region39: #{tpu_custom_call.1} parent=27 // pred_region
          %s860 = smul.u32 64, %s20
          %s862 = ssub.s32 16384, 16384
          %863 = vsyncadd %s853, %s862
          %s864 = smul.addr %s860, 2
          %s865 = smul.addr %s864, 128
          %s866 = scalar_lea.hbm %s2, %s865
          %s867 = sshll.u32 %s856, 4
          %s868 = int_to_ptr.vmem [resolvable:$true] %s867
          %873 = dma.vmem_to_hbm [thread:$0]  %s868, 16384, %s866, %s853, 256, 256, 16
        $region40: #{tpu_custom_call.1} parent=27 // pred_fallthru
          _
      $region28: #{tpu_custom_call.1} parent=5 // pred_fallthru
        _
      %p874 = scmp.le.s32.totalorder 2, %s15
      // Predicated region
      $region41: #{tpu_custom_call.1} parent=5 // pred_check
        %p875 = pneg %p874
      $region42: #{tpu_custom_call.1} parent=5 // pred_check_branch
        %877 = sbr.rel (%p875) target = $region44
      $region43: #{tpu_custom_call.1} parent=5 // pred_region
        %s878 = ssub.s32 %s15, 2
        // Predicated region
        $region45: #{tpu_custom_call.1} parent=43 // pred_check
          %p879 = pneg %p91
        $region46: #{tpu_custom_call.1} parent=43 // pred_check_branch
          %881 = sbr.rel (%p879) target = $region48
        $region47: #{tpu_custom_call.1} parent=43 // pred_region
          %s882 = sand.u32 %s76, 1
          %s883 = scalar_lea.sflag [#allocation4], %s882
          %s884 = sand.u32 %s76, 1
          %s885 = smul.addr %s884, 1024
          %s886 = scalar_lea.vmem [#allocation7], %s885
          %887 = dma.done %s883, 16384
        $region48: #{tpu_custom_call.1} parent=43 // pred_fallthru
          _
      $region44: #{tpu_custom_call.1} parent=5 // pred_fallthru
        _
    $region6: #{tpu_custom_call.1} parent=1 // loop_footer
      %s19 = sadd.s32 1, %s15
    $region7: #{tpu_custom_call.1} parent=1 // loop_footer_branch
      %14 = sbr.rel target = $region3
    $region8: #{tpu_custom_call.1} parent=1 // loop_exit
      _
    %888 = vsyncpa [#allocation3], 1
    %s889 = scalar_lea.sflag [#allocation3], 1
    %890 = vsyncpa %s889, 1
    %891 = vsyncpa [#allocation6], 1
    %892 = vsyncpa [#allocation4], 1
    %s893 = scalar_lea.sflag [#allocation4], 1
    %894 = vsyncpa %s893, 1

</llo_original>
